<compile_context>
chip_gen: v7x
topology: tpu7x:2x2x1
jax: 0.10.0
libtpu: 0.0.40
codegen_flags: <defaults>
</compile_context>

<pallas_src>
import functools

import jax
import jax.numpy as jnp
from jax.experimental import pallas as pl
from jax.experimental.pallas import tpu as pltpu

# Deterministic, in-script "weights" (exactly the values the module fills in).
GRAY_W = 1.0 / 3.0
LOG_FILTER = (
    (0, 0, 1, 0, 0),
    (0, 1, 2, 1, 0),
    (1, 2, -16, 2, 1),
    (0, 1, 2, 1, 0),
    (0, 0, 1, 0, 0),
)
# Row index 3 below is asymmetric; it is copied verbatim from the PyTorch
# module source (openmixup sobel.py), asymmetry and all.
DOG_FILTER = (
    (0, 0, -1, 0, 0),
    (0, -1, -2, -1, 0),
    (-1, -2, 16, -2, -1),
    (0, -2, -2, -1, 0),
    (0, 0, -1, 0, 0),
)


def _group_taps(filt):
    """Group non-zero 5x5 taps by weight -> ((weight, ((di, dj), ...)), ...)."""
    groups = {}
    for di in range(5):
        for dj in range(5):
            wt = float(filt[di][dj])
            if wt != 0.0:
                groups.setdefault(wt, []).append((di, dj))
    return tuple((wt, tuple(taps)) for wt, taps in groups.items())


def _pick_tile_h(h, max_rows):
    """Largest multiple-of-8 divisor of H that is <= max_rows; else whole image."""
    if h <= max_rows or h % 8 != 0:
        return h
    for th in range(max_rows - max_rows % 8, 7, -8):
        if h % th == 0:
            return th
    return h


def _laplacian_kernel(x_ref, top_ref, bot_ref, o_ref, gp_ref, *,
                      groups, th, out_w, halo_h):
    # x_ref:   (1, 3, th, W)      current RGB row tile
    # top_ref: (1, 3, halo_h, W)  row strip ending just above the tile (clamped)
    # bot_ref: (1, 3, halo_h, W)  row strip starting just below the tile (clamped)
    # o_ref:   (1, 1, th, W)
    # gp_ref:  (th + 4, W + 4)    VMEM scratch: reflect-padded grayscale tile
    i = pl.program_id(1)
    n_h = pl.num_programs(1)
    g = jnp.float32(GRAY_W)

    def to_gray(ref):
        v = ref[...].astype(jnp.float32)          # (1, 3, rows, W)
        return (v[0, 0] + v[0, 1] + v[0, 2]) * g  # (rows, W)

    gray = to_gray(x_ref)        # (th, W)
    gray_up = to_gray(top_ref)   # (halo_h, W)
    gray_dn = to_gray(bot_ref)   # (halo_h, W)

    # 2-row halos: interior tiles use neighbor rows; boundary tiles reflect
    # (reflect pad=2: padded row -2 -> row 2, -1 -> 1, H -> H-2, H+1 -> H-3).
    sel_first = jnp.where(i == 0, jnp.float32(1.0), jnp.float32(0.0))
    sel_last = jnp.where(i == n_h - 1, jnp.float32(1.0), jnp.float32(0.0))

    t0 = sel_first * gray[2:3, :] + (1.0 - sel_first) * gray_up[halo_h - 2:halo_h - 1, :]
    t1 = sel_first * gray[1:2, :] + (1.0 - sel_first) * gray_up[halo_h - 1:halo_h, :]
    b0 = sel_last * gray[th - 2:th - 1, :] + (1.0 - sel_last) * gray_dn[0:1, :]
    b1 = sel_last * gray[th - 3:th - 2, :] + (1.0 - sel_last) * gray_dn[1:2, :]

    # Assemble the reflect-padded grayscale tile in VMEM scratch.
    gp_ref[0:1, 2:out_w + 2] = t0
    gp_ref[1:2, 2:out_w + 2] = t1
    gp_ref[2:th + 2, 2:out_w + 2] = gray
    gp_ref[th + 2:th + 3, 2:out_w + 2] = b0
    gp_ref[th + 3:th + 4, 2:out_w + 2] = b1
    # Reflect the left/right 2-column borders (corners come out correct because
    # 2-D reflect padding is separable).
    gp_ref[:, 0:1] = gp_ref[:, 4:5]
    gp_ref[:, 1:2] = gp_ref[:, 3:4]
    gp_ref[:, out_w + 2:out_w + 3] = gp_ref[:, out_w:out_w + 1]
    gp_ref[:, out_w + 3:out_w + 4] = gp_ref[:, out_w - 1:out_w]

    gp = gp_ref[...]   # (th + 4, W + 4)

    # 5x5 cross-correlation (PyTorch conv2d semantics), unrolled with taps
    # grouped by weight; accumulator seeded from the first group.
    acc = None
    for wt, taps in groups:
        s = None
        for (di, dj) in taps:
            piece = gp[di:di + th, dj:dj + out_w]
            s = piece if s is None else s + piece
        if wt == 1.0:
            term = s
        elif wt == -1.0:
            term = -s
        elif wt == 2.0:
            term = s + s
        elif wt == -2.0:
            term = -(s + s)
        else:
            term = jnp.float32(wt) * s
        acc = term if acc is None else acc + term

    o_ref[...] = acc[None, None, :, :].astype(o_ref.dtype)


def laplacian_forward(x, mode="LoG", use_threshold=False, max_tile_h=128):
    """x: (N, 3, H, W) float32, NCHW. Returns (N, 1, H, W) float32."""
    assert mode in ("LoG", "DoG")
    filt = LOG_FILTER if mode == "LoG" else DOG_FILTER
    n, c, h, w = x.shape
    assert c == 3
    assert h >= 3 and w >= 3, "reflect padding of 2 requires H, W >= 3"

    th = _pick_tile_h(h, max_tile_h)     # rows per grid step (th == h if small)
    n_h = h // th
    halo_h = 8 if h >= 8 else h          # minimum legal sublane block height
    blocks_per_tile = max(th // halo_h, 1)
    max_halo_block = h // halo_h - 1     # last fully in-bounds halo block

    groups = _group_taps(filt)
    kernel = functools.partial(_laplacian_kernel, groups=groups, th=th,
                               out_w=w, halo_h=halo_h)

    out = pl.pallas_call(
        kernel,
        out_shape=jax.ShapeDtypeStruct((n, 1, h, w), jnp.float32),
        grid_spec=pltpu.PrefetchScalarGridSpec(
            num_scalar_prefetch=0,
            grid=(n, n_h),
            in_specs=[
                # current row tile
                pl.BlockSpec((1, 3, th, w), lambda b, i: (b, 0, i, 0)),
                # strip directly above the tile (clamped; unused when i == 0)
                pl.BlockSpec(
                    (1, 3, halo_h, w),
                    lambda b, i: (b, 0,
                                  jnp.maximum(i * blocks_per_tile - 1, 0), 0)),
                # strip directly below the tile (clamped; unused when i == last)
                pl.BlockSpec(
                    (1, 3, halo_h, w),
                    lambda b, i: (b, 0,
                                  jnp.minimum((i + 1) * blocks_per_tile,
                                              max_halo_block), 0)),
            ],
            out_specs=pl.BlockSpec((1, 1, th, w), lambda b, i: (b, 0, i, 0)),
            scratch_shapes=[pltpu.VMEM((th + 4, w + 4), jnp.float32)],
        ),
        compiler_params=pltpu.CompilerParams(
            dimension_semantics=("parallel", "parallel")),
    )(x, x, x)

    if use_threshold:
        # Glue (not the hot path): per-image 0.85-quantile threshold, as in the module.
        flat = out.reshape(n, 1, -1)
        thr = jnp.quantile(flat, 0.85, axis=2).reshape(n, 1, 1, 1)
        out = jnp.where(out < thr, 0.0, out)
    return out


def _reference(x, mode="LoG"):
    filt = LOG_FILTER if mode == "LoG" else DOG_FILTER
    g = jnp.float32(GRAY_W)
    gray = x[:, 0:1] * g + x[:, 1:2] * g + x[:, 2:3] * g
    gp = jnp.pad(gray, ((0, 0), (0, 0), (2, 2), (2, 2)), mode="reflect")
    wgt = jnp.asarray(filt, jnp.float32)[None, None]  # OIHW
    return jax.lax.conv_general_dilated(
        gp, wgt, window_strides=(1, 1), padding="VALID",
        dimension_numbers=("NCHW", "OIHW", "NCHW"))


if __name__ == "__main__":
    key = jax.random.PRNGKey(0)
    k1, k2 = jax.random.split(key)

    # Primary small test (single row-tile path).
    x1 = jax.random.uniform(k1, (2, 3, 16, 16), dtype=jnp.float32)
    y1 = laplacian_forward(x1, mode="LoG", use_threshold=False)
    jax.block_until_ready(y1)
    assert y1.shape == (2, 1, 16, 16)
    assert jnp.allclose(y1, _reference(x1, "LoG"), atol=1e-4, rtol=1e-4)

    # Exercise the multi-row-tile path (interior halo strips) and the DoG filter.
    x2 = jax.random.uniform(k2, (2, 3, 32, 32), dtype=jnp.float32)
    y2 = laplacian_forward(x2, mode="LoG", max_tile_h=8)
    y3 = laplacian_forward(x2, mode="DoG", max_tile_h=8)
    jax.block_until_ready((y2, y3))
    assert jnp.allclose(y2, _reference(x2, "LoG"), atol=1e-4, rtol=1e-4)
    assert jnp.allclose(y3, _reference(x2, "DoG"), atol=1e-4, rtol=1e-4)

    print("KERNEL_OK")
</pallas_src>

<mosaic_0001>
module attributes {stable_mosaic.version = 11 : i64} {
  func.func @_laplacian_kernel(%arg0: i32, %arg1: i32, %arg2: memref<1x3x16x16xf32, #tpu.memory_space<vmem>>, %arg3: memref<1x3x8x16xf32, #tpu.memory_space<vmem>>, %arg4: memref<1x3x8x16xf32, #tpu.memory_space<vmem>>, %arg5: memref<1x1x16x16xf32, #tpu.memory_space<vmem>>, %arg6: memref<20x20xf32, #tpu.memory_space<vmem>>) attributes {dimension_semantics = [#tpu.dimension_semantics<parallel>, #tpu.dimension_semantics<parallel>], iteration_bounds = array<i64: 2, 1>, scalar_prefetch = 0 : i64, scratch_operands = 1 : i64, tpu.core_type = #tpu.core_type<tc>, window_params = [{transform_indices = @transform_0, window_bounds = array<i64: 1, 3, 16, 16>}, {transform_indices = @transform_1, window_bounds = array<i64: 1, 3, 8, 16>}, {transform_indices = @transform_2, window_bounds = array<i64: 1, 3, 8, 16>}, {transform_indices = @transform_3, window_bounds = array<i64: 1, 1, 16, 16>}]} {
    %c0 = arith.constant 0 : index
    %c0_0 = arith.constant 0 : index
    %c0_1 = arith.constant 0 : index
    %c0_2 = arith.constant 0 : index
    %0 = vector.load %arg2[%c0, %c0_0, %c0_1, %c0_2] : memref<1x3x16x16xf32, #tpu.memory_space<vmem>>, vector<1x3x16x16xf32>
    %1 = vector.extract_strided_slice %0 {offsets = [0, 0, 0, 0], sizes = [1, 1, 16, 16], strides = [1, 1, 1, 1]} : vector<1x3x16x16xf32> to vector<1x1x16x16xf32>
    %2 = vector.shape_cast %1 : vector<1x1x16x16xf32> to vector<16x16xf32>
    %3 = vector.extract_strided_slice %0 {offsets = [0, 1, 0, 0], sizes = [1, 1, 16, 16], strides = [1, 1, 1, 1]} : vector<1x3x16x16xf32> to vector<1x1x16x16xf32>
    %4 = vector.shape_cast %3 : vector<1x1x16x16xf32> to vector<16x16xf32>
    %5 = arith.addf %2, %4 : vector<16x16xf32>
    %6 = vector.extract_strided_slice %0 {offsets = [0, 2, 0, 0], sizes = [1, 1, 16, 16], strides = [1, 1, 1, 1]} : vector<1x3x16x16xf32> to vector<1x1x16x16xf32>
    %7 = vector.shape_cast %6 : vector<1x1x16x16xf32> to vector<16x16xf32>
    %8 = arith.addf %5, %7 : vector<16x16xf32>
    %cst = arith.constant 0.333333343 : f32
    %9 = vector.broadcast %cst : f32 to vector<16x16xf32>
    %10 = arith.mulf %8, %9 : vector<16x16xf32>
    %c0_3 = arith.constant 0 : index
    %c0_4 = arith.constant 0 : index
    %c0_5 = arith.constant 0 : index
    %c0_6 = arith.constant 0 : index
    %11 = vector.load %arg3[%c0_3, %c0_4, %c0_5, %c0_6] : memref<1x3x8x16xf32, #tpu.memory_space<vmem>>, vector<1x3x8x16xf32>
    %12 = vector.extract_strided_slice %11 {offsets = [0, 0, 0, 0], sizes = [1, 1, 8, 16], strides = [1, 1, 1, 1]} : vector<1x3x8x16xf32> to vector<1x1x8x16xf32>
    %13 = vector.shape_cast %12 : vector<1x1x8x16xf32> to vector<8x16xf32>
    %14 = vector.extract_strided_slice %11 {offsets = [0, 1, 0, 0], sizes = [1, 1, 8, 16], strides = [1, 1, 1, 1]} : vector<1x3x8x16xf32> to vector<1x1x8x16xf32>
    %15 = vector.shape_cast %14 : vector<1x1x8x16xf32> to vector<8x16xf32>
    %16 = arith.addf %13, %15 : vector<8x16xf32>
    %17 = vector.extract_strided_slice %11 {offsets = [0, 2, 0, 0], sizes = [1, 1, 8, 16], strides = [1, 1, 1, 1]} : vector<1x3x8x16xf32> to vector<1x1x8x16xf32>
    %18 = vector.shape_cast %17 : vector<1x1x8x16xf32> to vector<8x16xf32>
    %19 = arith.addf %16, %18 : vector<8x16xf32>
    %cst_7 = arith.constant 0.333333343 : f32
    %20 = vector.broadcast %cst_7 : f32 to vector<8x16xf32>
    %21 = arith.mulf %19, %20 : vector<8x16xf32>
    %c0_8 = arith.constant 0 : index
    %c0_9 = arith.constant 0 : index
    %c0_10 = arith.constant 0 : index
    %c0_11 = arith.constant 0 : index
    %22 = vector.load %arg4[%c0_8, %c0_9, %c0_10, %c0_11] : memref<1x3x8x16xf32, #tpu.memory_space<vmem>>, vector<1x3x8x16xf32>
    %23 = vector.extract_strided_slice %22 {offsets = [0, 0, 0, 0], sizes = [1, 1, 8, 16], strides = [1, 1, 1, 1]} : vector<1x3x8x16xf32> to vector<1x1x8x16xf32>
    %24 = vector.shape_cast %23 : vector<1x1x8x16xf32> to vector<8x16xf32>
    %25 = vector.extract_strided_slice %22 {offsets = [0, 1, 0, 0], sizes = [1, 1, 8, 16], strides = [1, 1, 1, 1]} : vector<1x3x8x16xf32> to vector<1x1x8x16xf32>
    %26 = vector.shape_cast %25 : vector<1x1x8x16xf32> to vector<8x16xf32>
    %27 = arith.addf %24, %26 : vector<8x16xf32>
    %28 = vector.extract_strided_slice %22 {offsets = [0, 2, 0, 0], sizes = [1, 1, 8, 16], strides = [1, 1, 1, 1]} : vector<1x3x8x16xf32> to vector<1x1x8x16xf32>
    %29 = vector.shape_cast %28 : vector<1x1x8x16xf32> to vector<8x16xf32>
    %30 = arith.addf %27, %29 : vector<8x16xf32>
    %cst_12 = arith.constant 0.333333343 : f32
    %31 = vector.broadcast %cst_12 : f32 to vector<8x16xf32>
    %32 = arith.mulf %30, %31 : vector<8x16xf32>
    %c0_i32 = arith.constant 0 : i32
    %33 = arith.cmpi eq, %arg1, %c0_i32 : i32
    %cst_13 = arith.constant 1.000000e+00 : f32
    %cst_14 = arith.constant 0.000000e+00 : f32
    %34 = arith.select %33, %cst_13, %cst_14 : f32
    %c0_i32_15 = arith.constant 0 : i32
    %35 = arith.cmpi eq, %arg1, %c0_i32_15 : i32
    %cst_16 = arith.constant 1.000000e+00 : f32
    %cst_17 = arith.constant 0.000000e+00 : f32
    %36 = arith.select %35, %cst_16, %cst_17 : f32
    %37 = vector.extract_strided_slice %10 {offsets = [2, 0], sizes = [1, 16], strides = [1, 1]} : vector<16x16xf32> to vector<1x16xf32>
    %38 = vector.broadcast %34 : f32 to vector<1x16xf32>
    %39 = arith.mulf %38, %37 : vector<1x16xf32>
    %cst_18 = arith.constant 1.000000e+00 : f32
    %40 = arith.subf %cst_18, %34 : f32
    %41 = vector.extract_strided_slice %21 {offsets = [6, 0], sizes = [1, 16], strides = [1, 1]} : vector<8x16xf32> to vector<1x16xf32>
    %42 = vector.broadcast %40 : f32 to vector<1x16xf32>
    %43 = arith.mulf %42, %41 : vector<1x16xf32>
    %44 = arith.addf %39, %43 : vector<1x16xf32>
    %45 = vector.extract_strided_slice %10 {offsets = [1, 0], sizes = [1, 16], strides = [1, 1]} : vector<16x16xf32> to vector<1x16xf32>
    %46 = vector.broadcast %34 : f32 to vector<1x16xf32>
    %47 = arith.mulf %46, %45 : vector<1x16xf32>
    %cst_19 = arith.constant 1.000000e+00 : f32
    %48 = arith.subf %cst_19, %34 : f32
    %49 = vector.extract_strided_slice %21 {offsets = [7, 0], sizes = [1, 16], strides = [1, 1]} : vector<8x16xf32> to vector<1x16xf32>
    %50 = vector.broadcast %48 : f32 to vector<1x16xf32>
    %51 = arith.mulf %50, %49 : vector<1x16xf32>
    %52 = arith.addf %47, %51 : vector<1x16xf32>
    %53 = vector.extract_strided_slice %10 {offsets = [14, 0], sizes = [1, 16], strides = [1, 1]} : vector<16x16xf32> to vector<1x16xf32>
    %54 = vector.broadcast %36 : f32 to vector<1x16xf32>
    %55 = arith.mulf %54, %53 : vector<1x16xf32>
    %cst_20 = arith.constant 1.000000e+00 : f32
    %56 = arith.subf %cst_20, %36 : f32
    %57 = vector.extract_strided_slice %32 {offsets = [0, 0], sizes = [1, 16], strides = [1, 1]} : vector<8x16xf32> to vector<1x16xf32>
    %58 = vector.broadcast %56 : f32 to vector<1x16xf32>
    %59 = arith.mulf %58, %57 : vector<1x16xf32>
    %60 = arith.addf %55, %59 : vector<1x16xf32>
    %61 = vector.extract_strided_slice %10 {offsets = [13, 0], sizes = [1, 16], strides = [1, 1]} : vector<16x16xf32> to vector<1x16xf32>
    %62 = vector.broadcast %36 : f32 to vector<1x16xf32>
    %63 = arith.mulf %62, %61 : vector<1x16xf32>
    %cst_21 = arith.constant 1.000000e+00 : f32
    %64 = arith.subf %cst_21, %36 : f32
    %65 = vector.extract_strided_slice %32 {offsets = [1, 0], sizes = [1, 16], strides = [1, 1]} : vector<8x16xf32> to vector<1x16xf32>
    %66 = vector.broadcast %64 : f32 to vector<1x16xf32>
    %67 = arith.mulf %66, %65 : vector<1x16xf32>
    %68 = arith.addf %63, %67 : vector<1x16xf32>
    %c0_22 = arith.constant 0 : index
    %c2 = arith.constant 2 : index
    %69 = vector.load %arg6[%c0_22, %c2] : memref<20x20xf32, #tpu.memory_space<vmem>>, vector<1x16xf32>
    tpu.vector_store %arg6[%c0_22, %c2], %44 {strides = array<i32>} : memref<20x20xf32, #tpu.memory_space<vmem>>, vector<1x16xf32>,
    %c1 = arith.constant 1 : index
    %c2_23 = arith.constant 2 : index
    %70 = vector.load %arg6[%c1, %c2_23] : memref<20x20xf32, #tpu.memory_space<vmem>>, vector<1x16xf32>
    tpu.vector_store %arg6[%c1, %c2_23], %52 {strides = array<i32>} : memref<20x20xf32, #tpu.memory_space<vmem>>, vector<1x16xf32>,
    %c2_24 = arith.constant 2 : index
    %c2_25 = arith.constant 2 : index
    %71 = vector.load %arg6[%c2_24, %c2_25] : memref<20x20xf32, #tpu.memory_space<vmem>>, vector<16x16xf32>
    tpu.vector_store %arg6[%c2_24, %c2_25], %10 {strides = array<i32>} : memref<20x20xf32, #tpu.memory_space<vmem>>, vector<16x16xf32>,
    %c18 = arith.constant 18 : index
    %c2_26 = arith.constant 2 : index
    %72 = vector.load %arg6[%c18, %c2_26] : memref<20x20xf32, #tpu.memory_space<vmem>>, vector<1x16xf32>
    tpu.vector_store %arg6[%c18, %c2_26], %60 {strides = array<i32>} : memref<20x20xf32, #tpu.memory_space<vmem>>, vector<1x16xf32>,
    %c19 = arith.constant 19 : index
    %c2_27 = arith.constant 2 : index
    %73 = vector.load %arg6[%c19, %c2_27] : memref<20x20xf32, #tpu.memory_space<vmem>>, vector<1x16xf32>
    tpu.vector_store %arg6[%c19, %c2_27], %68 {strides = array<i32>} : memref<20x20xf32, #tpu.memory_space<vmem>>, vector<1x16xf32>,
    %c0_28 = arith.constant 0 : index
    %c4 = arith.constant 4 : index
    %74 = vector.load %arg6[%c0_28, %c4] : memref<20x20xf32, #tpu.memory_space<vmem>>, vector<20x1xf32>
    %c0_29 = arith.constant 0 : index
    %c0_30 = arith.constant 0 : index
    %75 = vector.load %arg6[%c0_29, %c0_30] : memref<20x20xf32, #tpu.memory_space<vmem>>, vector<20x1xf32>
    tpu.vector_store %arg6[%c0_29, %c0_30], %74 {strides = array<i32>} : memref<20x20xf32, #tpu.memory_space<vmem>>, vector<20x1xf32>,
    %c0_31 = arith.constant 0 : index
    %c3 = arith.constant 3 : index
    %76 = vector.load %arg6[%c0_31, %c3] : memref<20x20xf32, #tpu.memory_space<vmem>>, vector<20x1xf32>
    %c0_32 = arith.constant 0 : index
    %c1_33 = arith.constant 1 : index
    %77 = vector.load %arg6[%c0_32, %c1_33] : memref<20x20xf32, #tpu.memory_space<vmem>>, vector<20x1xf32>
    tpu.vector_store %arg6[%c0_32, %c1_33], %76 {strides = array<i32>} : memref<20x20xf32, #tpu.memory_space<vmem>>, vector<20x1xf32>,
    %c0_34 = arith.constant 0 : index
    %c16 = arith.constant 16 : index
    %78 = vector.load %arg6[%c0_34, %c16] : memref<20x20xf32, #tpu.memory_space<vmem>>, vector<20x1xf32>
    %c0_35 = arith.constant 0 : index
    %c18_36 = arith.constant 18 : index
    %79 = vector.load %arg6[%c0_35, %c18_36] : memref<20x20xf32, #tpu.memory_space<vmem>>, vector<20x1xf32>
    tpu.vector_store %arg6[%c0_35, %c18_36], %78 {strides = array<i32>} : memref<20x20xf32, #tpu.memory_space<vmem>>, vector<20x1xf32>,
    %c0_37 = arith.constant 0 : index
    %c15 = arith.constant 15 : index
    %80 = vector.load %arg6[%c0_37, %c15] : memref<20x20xf32, #tpu.memory_space<vmem>>, vector<20x1xf32>
    %c0_38 = arith.constant 0 : index
    %c19_39 = arith.constant 19 : index
    %81 = vector.load %arg6[%c0_38, %c19_39] : memref<20x20xf32, #tpu.memory_space<vmem>>, vector<20x1xf32>
    tpu.vector_store %arg6[%c0_38, %c19_39], %80 {strides = array<i32>} : memref<20x20xf32, #tpu.memory_space<vmem>>, vector<20x1xf32>,
    %c0_40 = arith.constant 0 : index
    %c0_41 = arith.constant 0 : index
    %82 = vector.load %arg6[%c0_40, %c0_41] : memref<20x20xf32, #tpu.memory_space<vmem>>, vector<20x20xf32>
    %83 = vector.extract_strided_slice %82 {offsets = [0, 2], sizes = [16, 16], strides = [1, 1]} : vector<20x20xf32> to vector<16x16xf32>
    %84 = vector.extract_strided_slice %82 {offsets = [1, 1], sizes = [16, 16], strides = [1, 1]} : vector<20x20xf32> to vector<16x16xf32>
    %85 = arith.addf %83, %84 : vector<16x16xf32>
    %86 = vector.extract_strided_slice %82 {offsets = [1, 3], sizes = [16, 16], strides = [1, 1]} : vector<20x20xf32> to vector<16x16xf32>
    %87 = arith.addf %85, %86 : vector<16x16xf32>
    %88 = vector.extract_strided_slice %82 {offsets = [2, 0], sizes = [16, 16], strides = [1, 1]} : vector<20x20xf32> to vector<16x16xf32>
    %89 = arith.addf %87, %88 : vector<16x16xf32>
    %90 = vector.extract_strided_slice %82 {offsets = [2, 4], sizes = [16, 16], strides = [1, 1]} : vector<20x20xf32> to vector<16x16xf32>
    %91 = arith.addf %89, %90 : vector<16x16xf32>
    %92 = vector.extract_strided_slice %82 {offsets = [3, 1], sizes = [16, 16], strides = [1, 1]} : vector<20x20xf32> to vector<16x16xf32>
    %93 = arith.addf %91, %92 : vector<16x16xf32>
    %94 = vector.extract_strided_slice %82 {offsets = [3, 3], sizes = [16, 16], strides = [1, 1]} : vector<20x20xf32> to vector<16x16xf32>
    %95 = arith.addf %93, %94 : vector<16x16xf32>
    %96 = vector.extract_strided_slice %82 {offsets = [4, 2], sizes = [16, 16], strides = [1, 1]} : vector<20x20xf32> to vector<16x16xf32>
    %97 = arith.addf %95, %96 : vector<16x16xf32>
    %98 = vector.extract_strided_slice %82 {offsets = [1, 2], sizes = [16, 16], strides = [1, 1]} : vector<20x20xf32> to vector<16x16xf32>
    %99 = vector.extract_strided_slice %82 {offsets = [2, 1], sizes = [16, 16], strides = [1, 1]} : vector<20x20xf32> to vector<16x16xf32>
    %100 = arith.addf %98, %99 : vector<16x16xf32>
    %101 = vector.extract_strided_slice %82 {offsets = [2, 3], sizes = [16, 16], strides = [1, 1]} : vector<20x20xf32> to vector<16x16xf32>
    %102 = arith.addf %100, %101 : vector<16x16xf32>
    %103 = vector.extract_strided_slice %82 {offsets = [3, 2], sizes = [16, 16], strides = [1, 1]} : vector<20x20xf32> to vector<16x16xf32>
    %104 = arith.addf %102, %103 : vector<16x16xf32>
    %105 = arith.addf %104, %104 : vector<16x16xf32>
    %106 = arith.addf %97, %105 : vector<16x16xf32>
    %107 = vector.extract_strided_slice %82 {offsets = [2, 2], sizes = [16, 16], strides = [1, 1]} : vector<20x20xf32> to vector<16x16xf32>
    %cst_42 = arith.constant -1.600000e+01 : f32
    %108 = vector.broadcast %cst_42 : f32 to vector<16x16xf32>
    %109 = arith.mulf %108, %107 : vector<16x16xf32>
    %110 = arith.addf %106, %109 : vector<16x16xf32>
    %111 = vector.shape_cast %110 : vector<16x16xf32> to vector<1x1x16x16xf32>
    %c0_43 = arith.constant 0 : index
    %c0_44 = arith.constant 0 : index
    %c0_45 = arith.constant 0 : index
    %c0_46 = arith.constant 0 : index
    %112 = vector.load %arg5[%c0_43, %c0_44, %c0_45, %c0_46] : memref<1x1x16x16xf32, #tpu.memory_space<vmem>>, vector<1x1x16x16xf32>
    tpu.vector_store %arg5[%c0_43, %c0_44, %c0_45, %c0_46], %111 {strides = array<i32>} : memref<1x1x16x16xf32, #tpu.memory_space<vmem>>, vector<1x1x16x16xf32>,
    return
  }
  func.func @transform_0(%arg0: i32, %arg1: i32) -> (i32, i32, i32, i32) {
    %c0_i32 = arith.constant 0 : i32
    %c0_i32_0 = arith.constant 0 : i32
    %c0_i32_1 = arith.constant 0 : i32
    return %arg0, %c0_i32, %arg1, %c0_i32_0 : i32, i32, i32, i32
  }
  func.func @transform_1(%arg0: i32, %arg1: i32) -> (i32, i32, i32, i32) {
    %c2_i32 = arith.constant 2 : i32
    %0 = arith.muli %arg1, %c2_i32 : i32
    %c1_i32 = arith.constant 1 : i32
    %1 = arith.subi %0, %c1_i32 : i32
    %c0_i32 = arith.constant 0 : i32
    %2 = arith.maxsi %1, %c0_i32 : i32
    %c0_i32_0 = arith.constant 0 : i32
    %c0_i32_1 = arith.constant 0 : i32
    %c0_i32_2 = arith.constant 0 : i32
    return %arg0, %c0_i32_0, %2, %c0_i32_1 : i32, i32, i32, i32
  }
  func.func @transform_2(%arg0: i32, %arg1: i32) -> (i32, i32, i32, i32) {
    %c1_i32 = arith.constant 1 : i32
    %0 = arith.addi %arg1, %c1_i32 : i32
    %c2_i32 = arith.constant 2 : i32
    %1 = arith.muli %0, %c2_i32 : i32
    %c1_i32_0 = arith.constant 1 : i32
    %2 = arith.minsi %1, %c1_i32_0 : i32
    %c0_i32 = arith.constant 0 : i32
    %c0_i32_1 = arith.constant 0 : i32
    %c0_i32_2 = arith.constant 0 : i32
    return %arg0, %c0_i32, %2, %c0_i32_1 : i32, i32, i32, i32
  }
  func.func @transform_3(%arg0: i32, %arg1: i32) -> (i32, i32, i32, i32) {
    %c0_i32 = arith.constant 0 : i32
    %c0_i32_0 = arith.constant 0 : i32
    %c0_i32_1 = arith.constant 0 : i32
    return %arg0, %c0_i32, %arg1, %c0_i32_0 : i32, i32, i32, i32
  }
}

</mosaic_0001>

<llo_original>
// kernel: tpu_custom_call.1
$region0: #{tpu_custom_call.1}
  #allocation0 [shape = 'u32[]', space=smem, size = 0x4, offset = 0x4, fixed_abs, tag = 'smem constant byte address 0x4 - core index']
  #allocation1 [shape = 'u32[144,128]{1,0:T(1,128)}', space=vmem, size = 0x12000, scoped, tag = 'internal scratch']
  #allocation2 [shape = 'f32[20,20]{1,0:T(8,128)}', space=vmem, size = 0x3000, scoped, tag = 'scratch operand']
  %s0 = inlined_call_operand.hbm [shape: f32[2,3,16,16], index: 0, kind: input, shape index: {}]
  %s1 = inlined_call_operand.hbm [shape: f32[2,3,16,16], index: 1, kind: input, shape index: {}]
  %s2 = inlined_call_operand.hbm [shape: f32[2,3,16,16], index: 2, kind: input, shape index: {}]
  %s3 = inlined_call_operand.hbm [shape: f32[2,1,16,16], index: 3, kind: output, shape index: {}]
  %s4 = sld [smem:[#allocation0]]
  $region57: #{tpu_custom_call.1} parent=0
    _
  %s6 = ssub.s32 1, %s4
  %s7 = scalar_select 0, %s6, %s4
  $region1: #{tpu_custom_call.1} parent=0
    #allocation3 [shape = 'u8[49152]{0}', space=vmem, size = 0xc000, scoped, tag = 'input window, operand 0']
    #allocation4 [shape = 's32[2]{0}', space=sflag, size = 0x8, scoped, tag = 'scoped memory for tpu_custom_call.1']
    #allocation5 [shape = 's32[2]{0}', space=sflag, size = 0x8, scoped, tag = 'scoped memory for tpu_custom_call.1']
    #allocation6 [shape = 'u8[24576]{0}', space=vmem, size = 0x6000, scoped, tag = 'input window, operand 1']
    #allocation7 [shape = 's32[2]{0}', space=sflag, size = 0x8, scoped, tag = 'scoped memory for tpu_custom_call.1']
    #allocation8 [shape = 'u8[24576]{0}', space=vmem, size = 0x6000, scoped, tag = 'input window, operand 2']
    #allocation9 [shape = 'u8[16384]{0}', space=vmem, size = 0x4000, scoped, tag = 'output window, operand 0']
    %8 = vsyncpa [#allocation4], 0
    %s9 = scalar_lea.sflag [#allocation4], 1
    %10 = vsyncpa %s9, 0
    %11 = vsyncpa [#allocation7], 0
    %s12 = scalar_lea.sflag [#allocation7], 1
    %13 = vsyncpa %s12, 0
    %14 = vsyncpa [#allocation5], 0
    %s15 = scalar_lea.sflag [#allocation5], 1
    %16 = vsyncpa %s15, 0
    loop: start=0, step=1, limit=4
    $region2: #{tpu_custom_call.1} parent=1 // loop_pre_header
      _
    $region3: #{tpu_custom_call.1} parent=1 // loop_header
      %s18 = sphi 0, %s22
      %p19 = scmp.ge.s32.totalorder %s18, 4
      %s25 = sphi 0, %s37
      %s26 = sphi 0, %s33
      %s27 = sphi 0, %s25
      %s28 = sphi 0, %s26
      %s29 = sphi 0, %s27
      %s30 = sphi 0, %s28
      %s42 = sphi 0, %s44
      %s45 = sphi 0, %s42
      %s46 = sphi 0, %s45
      %s62 = sphi 0, %s46
      %s78 = sphi 0, %s80
      %s81 = sphi 0, %s78
      %s82 = sphi 0, %s81
      %s98 = sphi 0, %s82
      %s114 = sphi 0, %s116
      %s117 = sphi 0, %s114
      %s118 = sphi 0, %s117
      %s134 = sphi 0, %s118
      %s142 = sphi 0, %s144
      %s145 = sphi 0, %s142
      %s146 = sphi 0, %s145
      %s162 = sphi 0, %s146
    $region4: #{tpu_custom_call.1} parent=1 // loop_header_branch
      %21 = sbr.rel (%p19) target = $region8
    $region5: #{tpu_custom_call.1} parent=1 // loop_body
      %s23 = ssub.s32 %s18, 1
      %s24 = ssub.s32 %s18, 2
      %s31 = sadd.s32 1, %s26
      %p32 = scmp.ge.s32.totalorder %s31, 1
      %s33 = scalar_select %p32, 0, %s31
      %s34 = sadd.s32 1, %s25
      %s35 = scalar_select %p32, %s34, %s25
      %p36 = scmp.ge.s32.totalorder %s35, 2
      %s37 = scalar_select %p36, 0, %s35
      %s38 = ssub.s32 %s25, %s37
      %s39 = ssub.s32 %s26, %s33
      %s40 = sor.u32 %s38, %s39
      %p41 = scmp.eq.s32.totalorder %s40, 0
      %s43 = sadd.s32 %s42, 1
      %s44 = scalar_select %p41, %s42, %s43
      %p47 = pneg %p41
      %p48 = scmp.eq.s32.totalorder %s18, 1
      %p49 = por %p47, %p48
      %p50 = scmp.ne.s32.totalorder %s42, %s45
      %p51 = scmp.eq.s32.totalorder %s18, 0
      %p52 = por %p50, %p51
      %p53 = scmp.ne.s32.totalorder %s42, %s45
      %p54 = scmp.eq.s32.totalorder %s23, 1
      %p55 = por %p53, %p54
      %p56 = scmp.ne.s32.totalorder %s45, %s46
      %p57 = scmp.eq.s32.totalorder %s23, 0
      %p58 = por %p56, %p57
      %p59 = scmp.ne.s32.totalorder %s45, %s46
      %p60 = scmp.eq.s32.totalorder %s24, 1
      %p61 = por %p59, %p60
      %p63 = scmp.ne.s32.totalorder %s46, %s62
      %p64 = scmp.eq.s32.totalorder %s24, 0
      %p65 = por %p63, %p64
      %s66 = smul.u32 %s26, 2
      %s67 = ssub.s32 %s66, 1
      %p68 = scmp.gt.s32.totalorder %s67, 0
      %s69 = scalar_select %p68, %s67, 0
      %s70 = smul.u32 %s33, 2
      %s71 = ssub.s32 %s70, 1
      %p72 = scmp.gt.s32.totalorder %s71, 0
      %s73 = scalar_select %p72, %s71, 0
      %s74 = ssub.s32 %s25, %s37
      %s75 = ssub.s32 %s69, %s73
      %s76 = sor.u32 %s74, %s75
      %p77 = scmp.eq.s32.totalorder %s76, 0
      %s79 = sadd.s32 %s78, 1
      %s80 = scalar_select %p77, %s78, %s79
      %p83 = pneg %p77
      %p84 = scmp.eq.s32.totalorder %s18, 1
      %p85 = por %p83, %p84
      %p86 = scmp.ne.s32.totalorder %s78, %s81
      %p87 = scmp.eq.s32.totalorder %s18, 0
      %p88 = por %p86, %p87
      %p89 = scmp.ne.s32.totalorder %s78, %s81
      %p90 = scmp.eq.s32.totalorder %s23, 1
      %p91 = por %p89, %p90
      %p92 = scmp.ne.s32.totalorder %s81, %s82
      %p93 = scmp.eq.s32.totalorder %s23, 0
      %p94 = por %p92, %p93
      %p95 = scmp.ne.s32.totalorder %s81, %s82
      %p96 = scmp.eq.s32.totalorder %s24, 1
      %p97 = por %p95, %p96
      %p99 = scmp.ne.s32.totalorder %s82, %s98
      %p100 = scmp.eq.s32.totalorder %s24, 0
      %p101 = por %p99, %p100
      %s102 = sadd.s32 %s26, 1
      %s103 = smul.u32 %s102, 2
      %p104 = scmp.lt.s32.totalorder %s103, 1
      %s105 = scalar_select %p104, %s103, 1
      %s106 = sadd.s32 %s33, 1
      %s107 = smul.u32 %s106, 2
      %p108 = scmp.lt.s32.totalorder %s107, 1
      %s109 = scalar_select %p108, %s107, 1
      %s110 = ssub.s32 %s25, %s37
      %s111 = ssub.s32 %s105, %s109
      %s112 = sor.u32 %s110, %s111
      %p113 = scmp.eq.s32.totalorder %s112, 0
      %s115 = sadd.s32 %s114, 1
      %s116 = scalar_select %p113, %s114, %s115
      %p119 = pneg %p113
      %p120 = scmp.eq.s32.totalorder %s18, 1
      %p121 = por %p119, %p120
      %p122 = scmp.ne.s32.totalorder %s114, %s117
      %p123 = scmp.eq.s32.totalorder %s18, 0
      %p124 = por %p122, %p123
      %p125 = scmp.ne.s32.totalorder %s114, %s117
      %p126 = scmp.eq.s32.totalorder %s23, 1
      %p127 = por %p125, %p126
      %p128 = scmp.ne.s32.totalorder %s117, %s118
      %p129 = scmp.eq.s32.totalorder %s23, 0
      %p130 = por %p128, %p129
      %p131 = scmp.ne.s32.totalorder %s117, %s118
      %p132 = scmp.eq.s32.totalorder %s24, 1
      %p133 = por %p131, %p132
      %p135 = scmp.ne.s32.totalorder %s118, %s134
      %p136 = scmp.eq.s32.totalorder %s24, 0
      %p137 = por %p135, %p136
      %s138 = ssub.s32 %s25, %s37
      %s139 = ssub.s32 %s26, %s33
      %s140 = sor.u32 %s138, %s139
      %p141 = scmp.eq.s32.totalorder %s140, 0
      %s143 = sadd.s32 %s142, 1
      %s144 = scalar_select %p141, %s142, %s143
      %p147 = pneg %p141
      %p148 = scmp.eq.s32.totalorder %s18, 1
      %p149 = por %p147, %p148
      %p150 = scmp.ne.s32.totalorder %s142, %s145
      %p151 = scmp.eq.s32.totalorder %s18, 0
      %p152 = por %p150, %p151
      %p153 = scmp.ne.s32.totalorder %s142, %s145
      %p154 = scmp.eq.s32.totalorder %s23, 1
      %p155 = por %p153, %p154
      %p156 = scmp.ne.s32.totalorder %s145, %s146
      %p157 = scmp.eq.s32.totalorder %s23, 0
      %p158 = por %p156, %p157
      %p159 = scmp.ne.s32.totalorder %s145, %s146
      %p160 = scmp.eq.s32.totalorder %s24, 1
      %p161 = por %p159, %p160
      %p163 = scmp.ne.s32.totalorder %s146, %s162
      %p164 = scmp.eq.s32.totalorder %s24, 0
      %p165 = por %p163, %p164
      %p166 = scmp.le.s32.totalorder 1, %s18
      %p167 = scmp.lt.s32.totalorder %s18, 3
      %p168 = pnand %p166, %p167
      %p169 = pneg %p168
      // Predicated region
      $region9: #{tpu_custom_call.1} parent=5 // pred_check
        _
      $region10: #{tpu_custom_call.1} parent=5 // pred_check_branch
        %171 = sbr.rel (%p168) target = $region12
      $region11: #{tpu_custom_call.1} parent=5 // pred_region
        %s172 = ssub.s32 %s18, 1
      $region12: #{tpu_custom_call.1} parent=5 // pred_fallthru
        _
      %p173 = scmp.lt.s32.totalorder %s18, 2
      // Predicated region
      $region13: #{tpu_custom_call.1} parent=5 // pred_check
        %p174 = pneg %p173
      $region14: #{tpu_custom_call.1} parent=5 // pred_check_branch
        %176 = sbr.rel (%p174) target = $region16
      $region15: #{tpu_custom_call.1} parent=5 // pred_region
        // Predicated region
        $region17: #{tpu_custom_call.1} parent=15 // pred_check
          %p177 = pneg %p52
        $region18: #{tpu_custom_call.1} parent=15 // pred_check_branch
          %179 = sbr.rel (%p177) target = $region20
        $region19: #{tpu_custom_call.1} parent=15 // pred_region
          %s180 = sand.u32 %s42, 1
          %s181 = scalar_lea.sflag [#allocation4], %s180
          %s182 = sand.u32 %s42, 1
          %s183 = smul.addr %s182, 48
          %s184 = scalar_lea.vmem [#allocation3], %s183
          %s185 = smul.u32 2, %s26
          %s187 = ssub.s32 768, 768
          %188 = vsyncadd %s181, %s187
          %s189 = smul.addr %s25, 6
          %s190 = sadd.s32 %s185, %s189
          %s191 = smul.addr %s190, 128
          %s192 = scalar_lea.hbm %s0, %s191
          %s193 = sshll.u32 %s184, 4
          %s194 = int_to_ptr.vmem [resolvable:$true] %s193
          %199 = dma.hbm_to_vmem [thread:$0]  %s192, 768, %s194, %s181, 128, 128, 8
        $region20: #{tpu_custom_call.1} parent=15 // pred_fallthru
          _
        // Predicated region
        $region21: #{tpu_custom_call.1} parent=15 // pred_check
          %p200 = pneg %p88
        $region22: #{tpu_custom_call.1} parent=15 // pred_check_branch
          %202 = sbr.rel (%p200) target = $region24
        $region23: #{tpu_custom_call.1} parent=15 // pred_region
          %s203 = sand.u32 %s18, 1
          %s204 = scalar_lea.sflag [#allocation7], %s203
          %s205 = sand.u32 %s78, 1
          %s206 = smul.addr %s205, 24
          %s207 = scalar_lea.vmem [#allocation6], %s206
          %s208 = smul.u32 %s26, 2
          %s209 = ssub.s32 %s208, 1
          %p210 = scmp.gt.s32.totalorder %s209, 0
          %s211 = scalar_select %p210, %s209, 0
          %s213 = ssub.s32 384, 384
          %214 = vsyncadd %s204, %s213
          %s215 = smul.addr %s25, 6
          %s216 = sadd.s32 %s211, %s215
          %s217 = smul.addr %s216, 128
          %s218 = scalar_lea.hbm %s1, %s217
          %s219 = sshll.u32 %s207, 4
          %s220 = int_to_ptr.vmem [resolvable:$true] %s219
          %225 = dma.hbm_to_vmem [thread:$0]  %s218, 384, %s220, %s204, 256, 128, 8
        $region24: #{tpu_custom_call.1} parent=15 // pred_fallthru
          _
        // Predicated region
        $region25: #{tpu_custom_call.1} parent=15 // pred_check
          %p226 = pneg %p124
        $region26: #{tpu_custom_call.1} parent=15 // pred_check_branch
          %228 = sbr.rel (%p226) target = $region28
        $region27: #{tpu_custom_call.1} parent=15 // pred_region
          %s229 = sand.u32 %s18, 1
          %s230 = scalar_lea.sflag [#allocation7], %s229
          %s231 = sand.u32 %s114, 1
          %s232 = smul.addr %s231, 24
          %s233 = scalar_lea.vmem [#allocation8], %s232
          %s234 = sadd.s32 %s26, 1
          %s235 = smul.u32 %s234, 2
          %p236 = scmp.lt.s32.totalorder %s235, 1
          %s237 = scalar_select %p236, %s235, 1
          %s239 = ssub.s32 384, 384
          %240 = vsyncadd %s230, %s239
          %s241 = smul.addr %s25, 6
          %s242 = sadd.s32 %s237, %s241
          %s243 = smul.addr %s242, 128
          %s244 = scalar_lea.hbm %s2, %s243
          %s245 = sshll.u32 %s233, 4
          %s246 = int_to_ptr.vmem [resolvable:$true] %s245
          %251 = dma.hbm_to_vmem [thread:$0]  %s244, 384, %s246, %s230, 256, 128, 8
        $region28: #{tpu_custom_call.1} parent=15 // pred_fallthru
          _
      $region16: #{tpu_custom_call.1} parent=5 // pred_fallthru
        _
      %p252 = scmp.le.s32.totalorder 1, %s18
      %p253 = scmp.lt.s32.totalorder %s18, 3
      %p254 = pnand %p252, %p253
      %p255 = pneg %p254
      // Predicated region
      $region29: #{tpu_custom_call.1} parent=5 // pred_check
        _
      $region30: #{tpu_custom_call.1} parent=5 // pred_check_branch
        %257 = sbr.rel (%p254) target = $region32
      $region31: #{tpu_custom_call.1} parent=5 // pred_region
        %s258 = ssub.s32 %s18, 1
        %s259 = sand.u32 %s45, 1
        %s260 = scalar_lea.sflag [#allocation4], %s259
        %s261 = sand.u32 %s45, 1
        %s262 = smul.addr %s261, 48
        %s263 = scalar_lea.vmem [#allocation3], %s262
        // Predicated region
        $region33: #{tpu_custom_call.1} parent=31 // pred_check
          %p264 = pneg %p58
        $region34: #{tpu_custom_call.1} parent=31 // pred_check_branch
          %266 = sbr.rel (%p264) target = $region36
        $region35: #{tpu_custom_call.1} parent=31 // pred_region
          %267 = dma.done %s260, 768
        $region36: #{tpu_custom_call.1} parent=31 // pred_fallthru
          _
        %s268 = sand.u32 %s23, 1
        %s269 = scalar_lea.sflag [#allocation7], %s268
        %s270 = sand.u32 %s81, 1
        %s271 = smul.addr %s270, 24
        %s272 = scalar_lea.vmem [#allocation6], %s271
        // Predicated region
        $region37: #{tpu_custom_call.1} parent=31 // pred_check
          %p273 = pneg %p94
        $region38: #{tpu_custom_call.1} parent=31 // pred_check_branch
          %275 = sbr.rel (%p273) target = $region40
        $region39: #{tpu_custom_call.1} parent=31 // pred_region
          %276 = dma.done %s269, 384
        $region40: #{tpu_custom_call.1} parent=31 // pred_fallthru
          _
        %s277 = sand.u32 %s23, 1
        %s278 = scalar_lea.sflag [#allocation7], %s277
        %s279 = sand.u32 %s117, 1
        %s280 = smul.addr %s279, 24
        %s281 = scalar_lea.vmem [#allocation8], %s280
        // Predicated region
        $region41: #{tpu_custom_call.1} parent=31 // pred_check
          %p282 = pneg %p130
        $region42: #{tpu_custom_call.1} parent=31 // pred_check_branch
          %284 = sbr.rel (%p282) target = $region44
        $region43: #{tpu_custom_call.1} parent=31 // pred_region
          %285 = dma.done %s278, 384
        $region44: #{tpu_custom_call.1} parent=31 // pred_fallthru
          _
        %s286 = sand.u32 %s45, 1
        %s287 = scalar_lea.sflag [#allocation4], %s286
        %s288 = sand.u32 %s45, 1
        %s289 = smul.addr %s288, 48
        %s290 = scalar_lea.vmem [#allocation3], %s289
        %p291 = pneg %p58
        %p292 = pneg %p55
        %s293 = sand.u32 %s23, 1
        %s294 = scalar_lea.sflag [#allocation7], %s293
        %s295 = sand.u32 %s81, 1
        %s296 = smul.addr %s295, 24
        %s297 = scalar_lea.vmem [#allocation6], %s296
        %p298 = pneg %p94
        %p299 = pneg %p91
        %s300 = sand.u32 %s23, 1
        %s301 = scalar_lea.sflag [#allocation7], %s300
        %s302 = sand.u32 %s117, 1
        %s303 = smul.addr %s302, 24
        %s304 = scalar_lea.vmem [#allocation8], %s303
        %p305 = pneg %p130
        %p306 = pneg %p127
        %p307 = pneg %p158
        %p308 = pneg %p155
        %s309 = sand.u32 %s145, 1
        %s310 = scalar_lea.sflag [#allocation5], %s309
        %s311 = sand.u32 %s145, 1
        %s312 = smul.addr %s311, 16
        %s313 = scalar_lea.vmem [#allocation9], %s312
        %s314 = smul.u32 2, %s28
        %s315 = smul.u32 %s28, 2
        %s316 = ssub.s32 %s315, 1
        %p317 = scmp.gt.s32.totalorder %s316, 0
        %s318 = scalar_select %p317, %s316, 0
        %s319 = sadd.s32 %s28, 1
        %s320 = smul.u32 %s319, 2
        %p321 = scmp.lt.s32.totalorder %s320, 1
        %s322 = scalar_select %p321, %s320, 1
        %s323 = smul.u32 2, %s28
        %v324 = vld [vmem:[%s263] sm:$0xff]
        %v325 = vld [vmem:[%s263 + $0x8] sm:$0xff]
        %v326 = vld [vmem:[%s263 + $0x10] sm:$0xff]
        %v327 = vld [vmem:[%s263 + $0x18] sm:$0xff]
        %v328 = vld [vmem:[%s263 + $0x20] sm:$0xff]
        %v329 = vld [vmem:[%s263 + $0x28] sm:$0xff]
        %v330 = vadd.f32 %v324, %v326
        %v331 = vadd.f32 %v325, %v327
        %v332 = vadd.f32 %v330, %v328
        %v333 = vadd.f32 %v331, %v329
        %v334 = vmul.f32 %v332, 0.33333334
        %v335 = vmul.f32 %v333, 0.33333334
        %v336 = vld [vmem:[%s272] sm:$0xff]
        %v337 = vld [vmem:[%s272 + $0x8] sm:$0xff]
        %v338 = vld [vmem:[%s272 + $0x10] sm:$0xff]
        %v339 = vadd.f32 %v336, %v337
        %v340 = vadd.f32 %v339, %v338
        %v341 = vmul.f32 %v340, 0.33333334
        %v342 = vld [vmem:[%s281] sm:$0xff]
        %v343 = vld [vmem:[%s281 + $0x8] sm:$0xff]
        %v344 = vld [vmem:[%s281 + $0x10] sm:$0xff]
        %v345 = vadd.f32 %v342, %v343
        %v346 = vadd.f32 %v345, %v344
        %v347 = vmul.f32 %v346, 0.33333334
        %p348 = scmp.eq.s32.totalorder %s28, 0
        %s349 = scalar_select %p348, 1.0, 0.0
        %v350 = vstv %s349
        %v351 = vmul.f32 %v350, %v334
        %s352 = ssub.f32 1.0, %s349
        %v353 = vstv %s352
        %v354 = vmul.f32 %v353, %v341
        %v356 = vrot.slane %v354, 4
        %v358 = vadd.f32 %v351, %v356
        %v359 = vrot.slane %v354, 6
        %v361 = vadd.f32 %v351, %v359
        %v362 = vmul.f32 %v350, %v335
        %v363 = vmul.f32 %v353, %v347
        %v365 = vrot.slane %v363, 2
        %v367 = vadd.f32 %v362, %v365
        %v368 = vrot.slane %v363, 4
        %v370 = vadd.f32 %v362, %v368
        %372 = vrot.lane.b32.xlu0 %v358, 2
        %v373 = vpop.permute.xlu0 %372
        %vm375 = vcmask 141330
        %376 = vst.msk [vmem:[#allocation2 - $0x2] sm:$0x4] %vm375, %v373
        %378 = vrot.lane.b32.xlu0 %v361, 2
        %v379 = vpop.permute.xlu0 %378
        %vm381 = vcmask 140305
        %382 = vst.msk [vmem:[#allocation2] sm:$0x2] %vm381, %v379
        %385 = vrot.lane.b32.xlu0 %v334, 2
        %v386 = vpop.permute.xlu0 %385
        %387 = vrot.lane.b32.xlu0 %v335, 2
        %v388 = vpop.permute.xlu0 %387
        %vm391 = vcmask 146448
        %392 = vst.msk [vmem:[#allocation2 + $0x2] sm:$0xff] %vm391, %v386
        %393 = vst.msk [vmem:[#allocation2 + $0xa] sm:$0xff] %vm391, %v388
        %395 = vrot.lane.b32.xlu0 %v367, 2
        %v396 = vpop.permute.xlu0 %395
        %vm398 = vcmask 145430
        %399 = vst.msk [vmem:[#allocation2 + $0xc] sm:$0x40] %vm398, %v396
        %401 = vrot.lane.b32.xlu0 %v370, 2
        %v402 = vpop.permute.xlu0 %401
        %vm404 = vcmask 144405
        %405 = vst.msk [vmem:[#allocation2 + $0xe] sm:$0x20] %vm404, %v402
        %v406 = vld [vmem:[#allocation2] sm:$0xff]
        %v407 = vld [vmem:[#allocation2 + $0x8] sm:$0xff]
        %v408 = vld [vmem:[#allocation2 + $0x10] sm:$0xf]
        %412 = vrot.lane.b32.xlu0 %v406, 124
        %v413 = vpop.permute.xlu0 %412
        %414 = vrot.lane.b32.xlu0 %v407, 124
        %v415 = vpop.permute.xlu0 %414
        %416 = vrot.lane.b32.xlu0 %v408, 124
        %v417 = vpop.permute.xlu0 %416
        %vm421 = vcmask 7168
        %422 = vst.msk [vmem:[#allocation2] sm:$0xff] %vm421, %v413
        %423 = vst.msk [vmem:[#allocation2 + $0x8] sm:$0xff] %vm421, %v415
        %vm424 = vcmask 3072
        %425 = vst.msk [vmem:[#allocation2 + $0x10] sm:$0xf] %vm424, %v417
        %v426 = vld [vmem:[#allocation2] sm:$0xff]
        %v427 = vld [vmem:[#allocation2 + $0x8] sm:$0xff]
        %v428 = vld [vmem:[#allocation2 + $0x10] sm:$0xf]
        %432 = vrot.lane.b32.xlu0 %v426, 126
        %v433 = vpop.permute.xlu0 %432
        %434 = vrot.lane.b32.xlu0 %v427, 126
        %v435 = vpop.permute.xlu0 %434
        %436 = vrot.lane.b32.xlu0 %v428, 126
        %v437 = vpop.permute.xlu0 %436
        %vm441 = vcmask 15368
        %442 = vst.msk [vmem:[#allocation2] sm:$0xff] %vm441, %v433
        %443 = vst.msk [vmem:[#allocation2 + $0x8] sm:$0xff] %vm441, %v435
        %vm444 = vcmask 11272
        %445 = vst.msk [vmem:[#allocation2 + $0x10] sm:$0xf] %vm444, %v437
        %v446 = vld [vmem:[#allocation2] sm:$0xff]
        %v447 = vld [vmem:[#allocation2 + $0x8] sm:$0xff]
        %v448 = vld [vmem:[#allocation2 + $0x10] sm:$0xf]
        %452 = vrot.lane.b32.xlu0 %v446, 2
        %v453 = vpop.permute.xlu0 %452
        %454 = vrot.lane.b32.xlu0 %v447, 2
        %v455 = vpop.permute.xlu0 %454
        %456 = vrot.lane.b32.xlu0 %v448, 2
        %v457 = vpop.permute.xlu0 %456
        %vm461 = vcmask 154768
        %462 = vst.msk [vmem:[#allocation2] sm:$0xff] %vm461, %v453
        %463 = vst.msk [vmem:[#allocation2 + $0x8] sm:$0xff] %vm461, %v455
        %vm464 = vcmask 150672
        %465 = vst.msk [vmem:[#allocation2 + $0x10] sm:$0xf] %vm464, %v457
        %v466 = vld [vmem:[#allocation2] sm:$0xff]
        %v467 = vld [vmem:[#allocation2 + $0x8] sm:$0xff]
        %v468 = vld [vmem:[#allocation2 + $0x10] sm:$0xf]
        %472 = vrot.lane.b32.xlu0 %v466, 4
        %v473 = vpop.permute.xlu0 %472
        %474 = vrot.lane.b32.xlu0 %v467, 4
        %v475 = vpop.permute.xlu0 %474
        %476 = vrot.lane.b32.xlu0 %v468, 4
        %v477 = vpop.permute.xlu0 %476
        %vm481 = vcmask 162968
        %482 = vst.msk [vmem:[#allocation2] sm:$0xff] %vm481, %v473
        %483 = vst.msk [vmem:[#allocation2 + $0x8] sm:$0xff] %vm481, %v475
        %vm484 = vcmask 158872
        %485 = vst.msk [vmem:[#allocation2 + $0x10] sm:$0xf] %vm484, %v477
        %v486 = vld [vmem:[#allocation2] sm:$0xff]
        %v487 = vld [vmem:[#allocation2 + $0x8] sm:$0xff]
        %v488 = vld [vmem:[#allocation2 + $0x10] sm:$0xf]
        %vm492 = vcmask 1046528
        %v493 = vrot.slane %v486, 1
        %v494 = vrot.slane %v487, 1
        %v495 = vsel %vm492, %v493, %v494
        %v496 = vrot.slane %v488, 1
        %v497 = vsel %vm492, %v494, %v496
        %498 = vrot.lane.b32.xlu0 %v495, 1
        %v499 = vpop.permute.xlu0 %498
        %500 = vrot.lane.b32.xlu0 %v497, 1
        %v501 = vpop.permute.xlu0 %500
        %v504 = vadd.f32 %v486, %v499
        %v505 = vadd.f32 %v487, %v501
        %506 = vrot.lane.b32.xlu0 %v495, 127
        %v507 = vpop.permute.xlu0 %506
        %508 = vrot.lane.b32.xlu0 %v497, 127
        %v509 = vpop.permute.xlu0 %508
        %v512 = vadd.f32 %v504, %v507
        %v513 = vadd.f32 %v505, %v509
        %vm514 = vcmask 1045504
        %v515 = vrot.slane %v486, 2
        %v516 = vrot.slane %v487, 2
        %v517 = vsel %vm514, %v515, %v516
        %v518 = vrot.slane %v488, 2
        %v519 = vsel %vm514, %v516, %v518
        %520 = vrot.lane.b32.xlu0 %v517, 2
        %v521 = vpop.permute.xlu0 %520
        %522 = vrot.lane.b32.xlu0 %v519, 2
        %v523 = vpop.permute.xlu0 %522
        %v526 = vadd.f32 %v512, %v521
        %v527 = vadd.f32 %v513, %v523
        %528 = vrot.lane.b32.xlu0 %v517, 126
        %v529 = vpop.permute.xlu0 %528
        %530 = vrot.lane.b32.xlu0 %v519, 126
        %v531 = vpop.permute.xlu0 %530
        %v534 = vadd.f32 %v526, %v529
        %v535 = vadd.f32 %v527, %v531
        %vm536 = vcmask 1044480
        %v537 = vrot.slane %v486, 3
        %v538 = vrot.slane %v487, 3
        %v539 = vsel %vm536, %v537, %v538
        %v540 = vrot.slane %v488, 3
        %v541 = vsel %vm536, %v538, %v540
        %542 = vrot.lane.b32.xlu0 %v539, 1
        %v543 = vpop.permute.xlu0 %542
        %544 = vrot.lane.b32.xlu0 %v541, 1
        %v545 = vpop.permute.xlu0 %544
        %v548 = vadd.f32 %v534, %v543
        %v549 = vadd.f32 %v535, %v545
        %550 = vrot.lane.b32.xlu0 %v539, 127
        %v551 = vpop.permute.xlu0 %550
        %552 = vrot.lane.b32.xlu0 %v541, 127
        %v553 = vpop.permute.xlu0 %552
        %v556 = vadd.f32 %v548, %v551
        %v557 = vadd.f32 %v549, %v553
        %vm558 = vcmask 1043456
        %v559 = vrot.slane %v486, 4
        %v560 = vrot.slane %v487, 4
        %v561 = vsel %vm558, %v559, %v560
        %v562 = vrot.slane %v488, 4
        %v563 = vsel %vm558, %v560, %v562
        %v566 = vadd.f32 %v556, %v561
        %v567 = vadd.f32 %v557, %v563
        %568 = vrot.lane.b32.xlu0 %v496, 1
        %v569 = vpop.permute.xlu0 %568
        %v571 = vadd.f32 %v488, %v569
        %572 = vrot.lane.b32.xlu0 %v496, 127
        %v573 = vpop.permute.xlu0 %572
        %v575 = vadd.f32 %v571, %v573
        %v579 = vadd.f32 %v512, %v517
        %v580 = vadd.f32 %v513, %v519
        %v581 = vadd.f32 %v575, %v518
        %v582 = vadd.f32 %v579, %v579
        %v583 = vadd.f32 %v580, %v580
        %v584 = vadd.f32 %v581, %v581
        %v588 = vrot.slane %v582, 1
        %v589 = vrot.slane %v583, 1
        %v590 = vsel %vm492, %v588, %v589
        %v591 = vrot.slane %v584, 1
        %v592 = vsel %vm492, %v589, %v591
        %v595 = vadd.f32 %v566, %v590
        %v596 = vadd.f32 %v567, %v592
        %v597 = vmul.f32 %v486, -16.0
        %v598 = vmul.f32 %v487, -16.0
        %v599 = vmul.f32 %v488, -16.0
        %v603 = vrot.slane %v597, 2
        %v604 = vrot.slane %v598, 2
        %v605 = vsel %vm514, %v603, %v604
        %v606 = vrot.slane %v599, 2
        %v607 = vsel %vm514, %v604, %v606
        %v610 = vadd.f32 %v595, %v605
        %v611 = vadd.f32 %v596, %v607
        %614 = vrot.lane.b32.xlu0 %v610, 126
        %v615 = vpop.permute.xlu0 %614
        %616 = vrot.lane.b32.xlu0 %v611, 126
        %v617 = vpop.permute.xlu0 %616
        %vm620 = vcmask 130048
        %621 = vst.msk [vmem:[%s313] sm:$0xff] %vm620, %v615
        %622 = vst.msk [vmem:[%s313 + $0x8] sm:$0xff] %vm620, %v617
        %s623 = sand.u32 %s145, 1
        %s624 = scalar_lea.sflag [#allocation5], %s623
        %s625 = sand.u32 %s145, 1
        %s626 = smul.addr %s625, 16
        %s627 = scalar_lea.vmem [#allocation9], %s626
        // Predicated region
        $region45: #{tpu_custom_call.1} parent=31 // pred_check
          %p628 = pneg %p155
        $region46: #{tpu_custom_call.1} parent=31 // pred_check_branch
          %630 = sbr.rel (%p628) target = $region48
        $region47: #{tpu_custom_call.1} parent=31 // pred_region
          %s631 = smul.u32 2, %s28
          %s633 = ssub.s32 256, 256
          %634 = vsyncadd %s624, %s633
          %s635 = smul.addr %s27, 2
          %s636 = sadd.s32 %s631, %s635
          %s637 = smul.addr %s636, 128
          %s638 = scalar_lea.hbm %s3, %s637
          %s639 = sshll.u32 %s627, 4
          %s640 = int_to_ptr.vmem [resolvable:$true] %s639
          %645 = dma.vmem_to_hbm [thread:$0]  %s640, 256, %s638, %s624, 128, 128, 8
        $region48: #{tpu_custom_call.1} parent=31 // pred_fallthru
          _
      $region32: #{tpu_custom_call.1} parent=5 // pred_fallthru
        _
      %p646 = scmp.le.s32.totalorder 2, %s18
      // Predicated region
      $region49: #{tpu_custom_call.1} parent=5 // pred_check
        %p647 = pneg %p646
      $region50: #{tpu_custom_call.1} parent=5 // pred_check_branch
        %649 = sbr.rel (%p647) target = $region52
      $region51: #{tpu_custom_call.1} parent=5 // pred_region
        %s650 = ssub.s32 %s18, 2
        // Predicated region
        $region53: #{tpu_custom_call.1} parent=51 // pred_check
          %p651 = pneg %p161
        $region54: #{tpu_custom_call.1} parent=51 // pred_check_branch
          %653 = sbr.rel (%p651) target = $region56
        $region55: #{tpu_custom_call.1} parent=51 // pred_region
          %s654 = sand.u32 %s146, 1
          %s655 = scalar_lea.sflag [#allocation5], %s654
          %s656 = sand.u32 %s146, 1
          %s657 = smul.addr %s656, 16
          %s658 = scalar_lea.vmem [#allocation9], %s657
          %659 = dma.done %s655, 256
        $region56: #{tpu_custom_call.1} parent=51 // pred_fallthru
          _
      $region52: #{tpu_custom_call.1} parent=5 // pred_fallthru
        _
    $region6: #{tpu_custom_call.1} parent=1 // loop_footer
      %s22 = sadd.s32 1, %s18
    $region7: #{tpu_custom_call.1} parent=1 // loop_footer_branch
      %17 = sbr.rel target = $region3
    $region8: #{tpu_custom_call.1} parent=1 // loop_exit
      _
    %660 = vsyncpa [#allocation4], 1
    %s661 = scalar_lea.sflag [#allocation4], 1
    %662 = vsyncpa %s661, 1
    %663 = vsyncpa [#allocation7], 1
    %s664 = scalar_lea.sflag [#allocation7], 1
    %665 = vsyncpa %s664, 1
    %666 = vsyncpa [#allocation5], 1
    %s667 = scalar_lea.sflag [#allocation5], 1
    %668 = vsyncpa %s667, 1

</llo_original>
